<compile_context>
chip_gen: v7x
topology: tpu7x:2x2x1
jax: 0.10.0
libtpu: 0.0.40
codegen_flags: <defaults>
</compile_context>

<pallas_src>
import functools
import math

import jax
import jax.numpy as jnp
from jax.experimental import pallas as pl
from jax.experimental.pallas import tpu as pltpu


# ----------------------------------------------------------------------------
# Kernels
# ----------------------------------------------------------------------------
def _fdft_kernel_single(f_ref, x_ref, o_ref, *, s_pad, real):
    """Single contraction step: whole N fits in VMEM."""
    # f_ref: (2*S_pad, N_pad) stacked [F_re ; F_im],  x_ref: (N_pad, tb)
    t = jnp.dot(f_ref[...], x_ref[...], preferred_element_type=jnp.float32)
    if real:
        re = t[:s_pad, :]          # S_pad is a multiple of 8 -> 8-aligned split
        im = t[s_pad:, :]
        o_ref[...] = jnp.sqrt(re * re + im * im)
    else:
        o_ref[...] = t


def _fdft_kernel_ktiled(f_ref, x_ref, o_ref, acc_ref, *, s_pad, real):
    """K-tiled contraction over N with an f32 accumulator scratch."""
    k = pl.program_id(1)

    @pl.when(k == 0)
    def _():
        acc_ref[...] = jnp.zeros_like(acc_ref)

    acc_ref[...] += jnp.dot(f_ref[...], x_ref[...],
                            preferred_element_type=jnp.float32)

    @pl.when(k == pl.num_programs(1) - 1)
    def _():
        t = acc_ref[...]
        if real:
            re = t[:s_pad, :]
            im = t[s_pad:, :]
            o_ref[...] = jnp.sqrt(re * re + im * im)
        else:
            o_ref[...] = t


# ----------------------------------------------------------------------------
# Helpers: Fourier operand, VMEM-aware tiling
# ----------------------------------------------------------------------------
def _round_up(a, b):
    return ((a + b - 1) // b) * b


def _vmem_capacity_bytes():
    try:
        return int(pltpu.get_tpu_info().vmem_capacity_bytes)
    except Exception:
        return 64 * 1024 * 1024    # conservative (v7x per-TensorCore VMEM)


def _make_fourier_stacked(samples, s_pad, n, n_pad, remove_zerocomp=True, freqs=None):
    """Stacked [F_re ; F_im] of FDFT.make_fourier(n), padded to (2*s_pad, n_pad).

    `freqs` follows the PyTorch module contract: it is the (possibly learned)
    self.freqs in [0, 1]; it is multiplied by (n - 1) here, like make_fourier.
    zerocomp (T[:,0]=T[:,-1]=0) is folded in by zeroing rows 0 and samples-1.
    """
    if freqs is None:
        freqs = jnp.linspace(0.0, 1.0, samples)
    freqs = jnp.asarray(freqs, jnp.float32) * (n - 1)
    cols = jnp.arange(n, dtype=jnp.float32)
    phi = (-2.0 * jnp.pi) * jnp.outer(freqs / n, cols)            # (S, n)
    scale = jnp.float32(1.0 / math.sqrt(n))
    f_re = scale * jnp.cos(phi)
    f_im = scale * jnp.sin(phi)
    if remove_zerocomp:
        keep = (jnp.ones((samples, 1), jnp.float32)
                .at[0, 0].set(0.0).at[samples - 1, 0].set(0.0))
        f_re = f_re * keep
        f_im = f_im * keep
    f = jnp.zeros((2 * s_pad, n_pad), jnp.float32)
    f = f.at[:samples, :n].set(f_re)
    f = f.at[s_pad:s_pad + samples, :n].set(f_im)
    return f


def _choose_tiles(s_pad, n, bc, op_bytes, out_rows, vmem_cap, max_col_tile):
    """Pick (tk, grid_k, tb, cols128) so the per-step working set fits VMEM."""
    cols128 = _round_up(max(bc, 1), 128)
    n8 = _round_up(max(n, 1), 8)
    budget = int(vmem_cap * 0.7)          # headroom under scoped/physical VMEM

    def working_set(tk, tb, f_bufs, with_acc):
        return (f_bufs * (2 * s_pad) * tk * op_bytes     # Fourier operand
                + 2 * tk * tb * op_bytes                 # x tile (double buffered)
                + 2 * out_rows * tb * 4                  # out tile (double buffered)
                + (1 if with_acc else 0) * (2 * s_pad) * tb * 4)

    tb_cap = max(128, min(_round_up(max_col_tile, 128), cols128))

    # 1) single K step: full padded N, constant (single-buffered) F.
    tb = tb_cap
    while tb >= 128:
        if working_set(n8, tb, 1, False) <= budget:
            return n8, 1, tb, cols128
        tb -= 128

    # 2) K-tiled: F's contraction tiles are lane tiles -> multiples of 128.
    tb = tb_cap
    while tb >= 128:
        tk = min(2048, _round_up(n, 128))
        while tk >= 128:
            if working_set(tk, tb, 2, True) <= budget:
                n_pad = _round_up(n, tk)
                return tk, -(-n_pad // tk), tb, cols128
            tk -= 128
        tb -= 128

    # 3) fallback: smallest legal tiles (vmem_limit_bytes still raised below).
    # TODO(synk): tile the 2*S output rows as a third grid axis for very large `samples`.
    tk = 128 if n > 8 else n8
    n_pad = _round_up(n, tk)
    return tk, -(-n_pad // tk), 128, cols128


def _balance_columns(cols128, tb, grid_k):
    """Balance column tiles; give the grid >=2 (ideally 4) steps when possible."""
    grid_cols = -(-cols128 // tb)
    floor_tb = 512 if cols128 >= 1024 else 128     # keep tiles near the lane sweet spot
    want = 2 if grid_k >= 2 else 4
    grid_cols = max(grid_cols, min(want, max(1, cols128 // floor_tb)))
    tb = max(128, _round_up(-(-cols128 // grid_cols), 128))
    grid_cols = -(-cols128 // tb)
    return tb, grid_cols


# ----------------------------------------------------------------------------
# Wrapper: FDFT.forward
# ----------------------------------------------------------------------------
def fdft_forward(x, samples, *, real=False, remove_zerocomp=True, freqs=None,
                 operand_dtype=None, max_col_tile=2048, fuse_input=False):
    """Pallas-TPU FDFT.forward.  x: (B, N, C) real -> (B, samples, C).

    operand_dtype=jnp.bfloat16 gives ~2-3x MXU throughput and halves operand DMA
    bytes on every generation (v5e included); accumulation stays f32.  Default
    (None) keeps f32 operands for exact parity with the reference.
    fuse_input=True adds allow_input_fusion so XLA may fuse the wrapper-side
    transpose/pad into the pallas_call input (saves one HBM pass over x).
    """
    if x.ndim != 3:
        raise ValueError('Input must be of shape (b, N, C)')
    B, N, C = x.shape
    S = int(samples)
    s_pad = _round_up(S, 8)                    # 8-aligned re/im row split

    op_dtype = jnp.float32 if operand_dtype is None else operand_dtype
    op_bytes = jnp.dtype(op_dtype).itemsize
    out_rows = s_pad if real else 2 * s_pad

    vmem_cap = _vmem_capacity_bytes()
    bc = B * C

    tk, grid_k, tb, cols128 = _choose_tiles(
        s_pad, N, bc, op_bytes, out_rows, vmem_cap, max_col_tile)
    tb, grid_cols = _balance_columns(cols128, tb, grid_k)
    cols = grid_cols * tb
    n_pad = grid_k * tk

    # Constant Fourier operand (zerocomp folded in), padded to (2*s_pad, n_pad).
    fs = _make_fourier_stacked(S, s_pad, N, n_pad, remove_zerocomp, freqs)
    fs = fs.astype(op_dtype)

    # Lane-dense layout: columns = batch*channels, zero-padded to `cols`.
    x_cols = jnp.transpose(x.astype(jnp.float32), (1, 0, 2)).reshape(N, bc)
    x_cols = jnp.pad(x_cols, ((0, n_pad - N), (0, cols - bc))).astype(op_dtype)

    # F is single-buffered when it is constant across all grid steps.
    if grid_k == 1:
        f_spec = pl.BlockSpec((2 * s_pad, tk), lambda j, k: (0, k),
                              pipeline_mode=pl.Buffered(1))
        scratch = []
        kernel = functools.partial(_fdft_kernel_single, s_pad=s_pad, real=real)
    else:
        f_spec = pl.BlockSpec((2 * s_pad, tk), lambda j, k: (0, k))
        scratch = [pltpu.VMEM((2 * s_pad, tb), jnp.float32)]
        kernel = functools.partial(_fdft_kernel_ktiled, s_pad=s_pad, real=real)

    in_specs = [f_spec,
                pl.BlockSpec((tk, tb), lambda j, k: (k, j))]
    out_specs = pl.BlockSpec((out_rows, tb), lambda j, k: (0, j))

    # Scoped-VMEM limit from the actual working set (+ headroom), capped below
    # physical VMEM (64 MiB on v7x, 128 MiB on v5e/v6e).
    f_bufs = 1 if grid_k == 1 else 2
    ws = (f_bufs * 2 * s_pad * tk * op_bytes + 2 * tk * tb * op_bytes
          + 2 * out_rows * tb * 4
          + (0 if grid_k == 1 else 2 * s_pad * tb * 4))
    vmem_limit = int(min(vmem_cap * 0.98, max(32 << 20, ws + (16 << 20))))

    cost = pl.CostEstimate(
        flops=2 * (2 * s_pad) * n_pad * cols,
        transcendentals=0,
        bytes_accessed=op_bytes * (2 * s_pad * n_pad + n_pad * cols)
                       + 4 * out_rows * cols)

    y = pl.pallas_call(
        kernel,
        out_shape=jax.ShapeDtypeStruct((out_rows, cols), jnp.float32),
        grid_spec=pltpu.PrefetchScalarGridSpec(
            num_scalar_prefetch=0,
            grid=(grid_cols, grid_k),
            in_specs=in_specs,
            out_specs=out_specs,
            scratch_shapes=scratch),
        compiler_params=pltpu.CompilerParams(
            dimension_semantics=("parallel", "arbitrary"),
            vmem_limit_bytes=vmem_limit,
            allow_input_fusion=[False, True] if fuse_input else None),
        cost_estimate=cost,
    )(fs, x_cols)

    if real:
        mag = y[:S, :bc].reshape(S, B, C)
        return jnp.transpose(mag, (1, 0, 2))                         # (B, S, C) f32
    re = y[:S, :bc].reshape(S, B, C)
    im = y[s_pad:s_pad + S, :bc].reshape(S, B, C)
    return jnp.transpose(jax.lax.complex(re, im), (1, 0, 2))         # (B, S, C) c64


# ----------------------------------------------------------------------------
# Pure-JAX reference (for correctness sanity check)
# ----------------------------------------------------------------------------
def reference_fdft(x, samples, *, real=False, remove_zerocomp=True):
    B, N, C = x.shape
    freqs = jnp.linspace(0.0, 1.0, samples).astype(jnp.float32) * (N - 1)
    phi = -2.0 * jnp.pi * jnp.outer(freqs / N, jnp.arange(N, dtype=jnp.float32))
    scale = 1.0 / math.sqrt(N)
    re = jnp.einsum('sn,bnc->bsc', scale * jnp.cos(phi), x)
    im = jnp.einsum('sn,bnc->bsc', scale * jnp.sin(phi), x)
    if remove_zerocomp:
        re = re.at[:, 0, :].set(0.0).at[:, -1, :].set(0.0)
        im = im.at[:, 0, :].set(0.0).at[:, -1, :].set(0.0)
    if real:
        return jnp.sqrt(re * re + im * im)
    return jax.lax.complex(re, im)


if __name__ == "__main__":
    B, N, C = 2, 16, 4        # (batch, sequence length, channels)
    SAMPLES = 12              # not a multiple of 8 -> exercises 8-aligned row padding

    key = jax.random.PRNGKey(0)
    x = jax.random.normal(key, (B, N, C), jnp.float32)

    # real=True path (|T| -> float32) and default real=False path (complex64).
    y_abs = jax.block_until_ready(fdft_forward(x, SAMPLES, real=True))
    y_cplx = jax.block_until_ready(fdft_forward(x, SAMPLES, real=False))

    ref_abs = reference_fdft(x, SAMPLES, real=True)
    ref_cplx = reference_fdft(x, SAMPLES, real=False)

    assert y_abs.shape == (B, SAMPLES, C) and y_abs.dtype == jnp.float32, y_abs.shape
    assert y_cplx.shape == (B, SAMPLES, C) and jnp.iscomplexobj(y_cplx), y_cplx.shape
    assert jnp.allclose(y_abs, ref_abs, rtol=1e-3, atol=1e-3)
    assert jnp.allclose(y_cplx, ref_cplx, rtol=1e-3, atol=1e-3)

    print("KERNEL_OK")
</pallas_src>

<mosaic_0001>
module attributes {stable_mosaic.version = 11 : i64} {
  func.func @_fdft_kernel_single(%arg0: i32, %arg1: i32, %arg2: memref<32x16xf32, #tpu.memory_space<vmem>>, %arg3: memref<16x128xf32, #tpu.memory_space<vmem>>, %arg4: memref<16x128xf32, #tpu.memory_space<vmem>>) attributes {dimension_semantics = [#tpu.dimension_semantics<parallel>, #tpu.dimension_semantics<arbitrary>], iteration_bounds = array<i64: 1, 1>, scalar_prefetch = 0 : i64, scratch_operands = 0 : i64, tpu.core_type = #tpu.core_type<tc>, window_params = [{pipeline_mode = #tpu.pipeline_mode<synchronous>, transform_indices = @transform_0, window_bounds = array<i64: 32, 16>}, {transform_indices = @transform_1, window_bounds = array<i64: 16, 128>}, {transform_indices = @transform_2, window_bounds = array<i64: 16, 128>}]} {
    %c0 = arith.constant 0 : index
    %c0_0 = arith.constant 0 : index
    %0 = vector.load %arg2[%c0, %c0_0] : memref<32x16xf32, #tpu.memory_space<vmem>>, vector<32x16xf32>
    %c0_1 = arith.constant 0 : index
    %c0_2 = arith.constant 0 : index
    %1 = vector.load %arg3[%c0_1, %c0_2] : memref<16x128xf32, #tpu.memory_space<vmem>>, vector<16x128xf32>
    %cst = arith.constant dense<0.000000e+00> : vector<32x128xf32>
    %2 = tpu.matmul %0, %1, %cst {dimension_numbers = #tpu.dot_dimension_numbers<[1], [0], [0], [1], [0, 0, 1, 1], [], []>} : vector<32x16xf32>, vector<16x128xf32>, vector<32x128xf32> -> vector<32x128xf32>
    %3 = vector.extract_strided_slice %2 {offsets = [0, 0], sizes = [16, 128], strides = [1, 1]} : vector<32x128xf32> to vector<16x128xf32>
    %4 = vector.extract_strided_slice %2 {offsets = [16, 0], sizes = [16, 128], strides = [1, 1]} : vector<32x128xf32> to vector<16x128xf32>
    %5 = arith.mulf %3, %3 : vector<16x128xf32>
    %6 = arith.mulf %4, %4 : vector<16x128xf32>
    %7 = arith.addf %5, %6 : vector<16x128xf32>
    %8 = math.sqrt %7 : vector<16x128xf32>
    %c0_3 = arith.constant 0 : index
    %c0_4 = arith.constant 0 : index
    %9 = vector.load %arg4[%c0_3, %c0_4] : memref<16x128xf32, #tpu.memory_space<vmem>>, vector<16x128xf32>
    tpu.vector_store %arg4[%c0_3, %c0_4], %8 {strides = array<i32>} : memref<16x128xf32, #tpu.memory_space<vmem>>, vector<16x128xf32>,
    return
  }
  func.func @transform_0(%arg0: i32, %arg1: i32) -> (i32, i32) {
    %c0_i32 = arith.constant 0 : i32
    %c0_i32_0 = arith.constant 0 : i32
    return %c0_i32, %arg1 : i32, i32
  }
  func.func @transform_1(%arg0: i32, %arg1: i32) -> (i32, i32) {
    %c0_i32 = arith.constant 0 : i32
    return %arg1, %arg0 : i32, i32
  }
  func.func @transform_2(%arg0: i32, %arg1: i32) -> (i32, i32) {
    %c0_i32 = arith.constant 0 : i32
    %c0_i32_0 = arith.constant 0 : i32
    return %c0_i32, %arg0 : i32, i32
  }
}

</mosaic_0001>

<llo_original>
// kernel: tpu_custom_call.1
$region0: #{tpu_custom_call.1}
  #allocation0 [shape = 'u32[]', space=smem, size = 0x4, offset = 0x4, fixed_abs, tag = 'smem constant byte address 0x4 - core index']
  #allocation1 [shape = 'u32[144,128]{1,0:T(1,128)}', space=vmem, size = 0x12000, scoped, tag = 'internal scratch']
  %s0 = inlined_call_operand.vmem [shape: f32[32,16], index: 0, kind: input, shape index: {}]
  %s1 = inlined_call_operand.vmem [shape: f32[16,128], index: 1, kind: input, shape index: {}]
  %s2 = inlined_call_operand.hbm [shape: f32[16,128], index: 2, kind: output, shape index: {}]
  %s3 = sld [smem:[#allocation0]]
  $region18: #{tpu_custom_call.1} parent=0
    _
  %s5 = ssub.s32 1, %s3
  %s6 = scalar_select 0, %s5, %s3
  $region1: #{tpu_custom_call.1} parent=0
    #allocation2 [shape = 'u8[8192]{0}', space=vmem, size = 0x2000, scoped, tag = 'output window, operand 0, single buffered']
    #allocation3 [shape = 's32[1]{0}', space=sflag, size = 0x4, scoped, tag = 'scoped memory for tpu_custom_call.1']
    %7 = vsyncpa [#allocation3], 0
    // Predicated region
    $region2: #{tpu_custom_call.1} parent=1 // pred_check
      _
    $region3: #{tpu_custom_call.1} parent=1 // pred_check_branch
      %9 = sbr.rel (0) target = $region5
    $region4: #{tpu_custom_call.1} parent=1 // pred_region
      _
    $region5: #{tpu_custom_call.1} parent=1 // pred_fallthru
      _
    // Predicated region
    $region6: #{tpu_custom_call.1} parent=1 // pred_check
      _
    $region7: #{tpu_custom_call.1} parent=1 // pred_check_branch
      %11 = sbr.rel (0) target = $region9
    $region8: #{tpu_custom_call.1} parent=1 // pred_region
      _
    $region9: #{tpu_custom_call.1} parent=1 // pred_fallthru
      _
    %v12 = vld [vmem:[%s0] sm:$0xff]
    %v13 = vld [vmem:[%s0 + $0x8] sm:$0xff]
    %v14 = vld [vmem:[%s0 + $0x10] sm:$0xff]
    %v15 = vld [vmem:[%s0 + $0x18] sm:$0xff]
    %v16 = vld [vmem:[%s1] sm:$0xff]
    %v17 = vld [vmem:[%s1 + $0x8] sm:$0xff]
    %vm18 = vcmask 130048
    %v20 = vsel %vm18, %v12, 0
    %v23 = vsel %vm18, %v13, 0
    %v26 = vsel %vm18, %v14, 0
    %v29 = vsel %vm18, %v15, 0
    %31 = vmatprep.subr.mxu0 0.0
    %32 = vmatpush1.msra.mxu0 %v16
    %33 = vmatprep.subr.mxu0 0.0
    %34 = vmatpush1.msra.mxu0 %v17
    %35 = vmatprep.subr.mxu0 0.0
    %36 = vmatpush1.msra.mxu0 0.0
    %37 = vmatprep.subr.mxu0 0.0
    %38 = vmatpush1.msra.mxu0 0.0
    %39 = vmatprep.subr.mxu0 0.0
    %40 = vmatpush1.msra.mxu0 0.0
    %41 = vmatprep.subr.mxu0 0.0
    %42 = vmatpush1.msra.mxu0 0.0
    %43 = vmatprep.subr.mxu0 0.0
    %44 = vmatpush1.msra.mxu0 0.0
    %45 = vmatprep.subr.mxu0 0.0
    %46 = vmatpush1.msra.mxu0 0.0
    %47 = vmatprep.subr.mxu0 0.0
    %48 = vmatpush1.msra.mxu0 0.0
    %49 = vmatprep.subr.mxu0 0.0
    %50 = vmatpush1.msra.mxu0 0.0
    %51 = vmatprep.subr.mxu0 0.0
    %52 = vmatpush1.msra.mxu0 0.0
    %53 = vmatprep.subr.mxu0 0.0
    %54 = vmatpush1.msra.mxu0 0.0
    %55 = vmatprep.subr.mxu0 0.0
    %56 = vmatpush1.msra.mxu0 0.0
    %57 = vmatprep.subr.mxu0 0.0
    %58 = vmatpush1.msra.mxu0 0.0
    %59 = vmatprep.subr.mxu0 0.0
    %60 = vmatpush1.msra.mxu0 0.0
    %61 = vmatprep.subr.mxu0 0.0
    %62 = vmatpush1.msra.mxu0 0.0
    %63 = vmatprep.subr.mxu0 0.0
    %64 = vmatpush1.msra.mxu0 0.0
    %65 = vmatprep.subr.mxu0 0.0
    %66 = vmatpush1.msra.mxu0 0.0
    %67 = vmatprep.subr.mxu0 0.0
    %68 = vmatpush1.msra.mxu0 0.0
    %69 = vmatprep.subr.mxu0 0.0
    %70 = vmatpush1.msra.mxu0 0.0
    %71 = vmatprep.subr.mxu0 0.0
    %72 = vmatpush1.msra.mxu0 0.0
    %73 = vmatprep.subr.mxu0 0.0
    %74 = vmatpush1.msra.mxu0 0.0
    %75 = vmatprep.subr.mxu0 0.0
    %76 = vmatpush1.msra.mxu0 0.0
    %77 = vmatprep.subr.mxu0 0.0
    %78 = vmatpush1.msra.mxu0 0.0
    %79 = vmatprep.subr.mxu0 0.0
    %80 = vmatpush1.msra.mxu0 0.0
    %81 = vmatprep.subr.mxu0 0.0
    %82 = vmatpush1.msra.mxu0 0.0
    %83 = vmatprep.subr.mxu0 0.0
    %84 = vmatpush1.msra.mxu0 0.0
    %85 = vmatprep.subr.mxu0 0.0
    %86 = vmatpush1.msra.mxu0 0.0
    %87 = vmatprep.subr.mxu0 0.0
    %88 = vmatpush1.msra.mxu0 0.0
    %89 = vmatprep.subr.mxu0 0.0
    %90 = vmatpush1.msra.mxu0 0.0
    %91 = vmatprep.subr.mxu0 0.0
    %92 = vmatpush1.msra.mxu0 0.0
    %93 = vmatprep.subr.mxu0 0.0
    %94 = vmatpush1.msra.mxu0 0.0
    %95 = vmatprep.mubr.f32.mxu0 0.0
    %96 = vmatmul.mubr.f32.gmra.mrb[0].mxu0 %v20
    %v97 = vpop.f32.mrb[0].mxu0
    %v98 = vadd.f32 0.0, %v97
    %v99 = vpop.f32.mrb[0].mxu0
    %100 = vmatprep.mubr.f32.mxu0 0.0
    %101 = vmatmul.mubr.f32.gmra.mrb[0].mxu0 %v23
    %v102 = vpop.f32.mrb[0].mxu0
    %v103 = vadd.f32 0.0, %v102
    %v104 = vpop.f32.mrb[0].mxu0
    %105 = vmatprep.mubr.f32.mxu0 0.0
    %106 = vmatmul.mubr.f32.gmra.mrb[0].mxu0 %v26
    %v107 = vpop.f32.mrb[0].mxu0
    %v108 = vadd.f32 0.0, %v107
    %v109 = vpop.f32.mrb[0].mxu0
    %110 = vmatprep.mubr.f32.mxu0 0.0
    %111 = vmatmul.mubr.f32.gmra.mrb[0].mxu0 %v29
    %v112 = vpop.f32.mrb[0].mxu0
    %v113 = vadd.f32 0.0, %v112
    %v114 = vpop.f32.mrb[0].mxu0
    %115 = vdwg.mxu0
    %v116 = vmul.f32 %v98, %v98
    %v117 = vmul.f32 %v103, %v103
    %v118 = vmul.f32 %v108, %v108
    %v119 = vmul.f32 %v113, %v113
    %v120 = vadd.f32 %v116, %v118
    %v121 = vadd.f32 %v117, %v119
    %v122 = vrsqrt.pop %v120
    %v123 = vmul.f32 %v120, %v122
    %vm124 = vcmp.eq.f32.partialorder %v120, inf
    %v125 = vsel %vm124, %v120, %v123
    %vm126 = vcmp.eq.f32.partialorder %v120, 0.0
    %v127 = vand.u32 %v120, 2147483648
    %v128 = vsel %vm126, %v127, %v125
    %v129 = vrsqrt.pop %v121
    %v130 = vmul.f32 %v121, %v129
    %vm131 = vcmp.eq.f32.partialorder %v121, inf
    %v132 = vsel %vm131, %v121, %v130
    %vm133 = vcmp.eq.f32.partialorder %v121, 0.0
    %v134 = vand.u32 %v121, 2147483648
    %v135 = vsel %vm133, %v134, %v132
    %136 = vst [vmem:[#allocation2] sm:$0xff] %v128
    %137 = vst [vmem:[#allocation2 + $0x8] sm:$0xff] %v135
    // Predicated region
    $region10: #{tpu_custom_call.1} parent=1 // pred_check
      _
    $region11: #{tpu_custom_call.1} parent=1 // pred_check_branch
      %139 = sbr.rel (0) target = $region13
    $region12: #{tpu_custom_call.1} parent=1 // pred_region
      %s141 = ssub.s32 256, 256
      %142 = vsyncadd [#allocation3], %s141
      %s143 = sshll.u32 [#allocation2], 4
      %s144 = int_to_ptr.vmem [resolvable:$true] %s143
      %149 = dma.vmem_to_hbm [thread:$0]  %s144, 256, %s2, [#allocation3], 128, 128, 8
    $region13: #{tpu_custom_call.1} parent=1 // pred_fallthru
      _
    // Predicated region
    $region14: #{tpu_custom_call.1} parent=1 // pred_check
      _
    $region15: #{tpu_custom_call.1} parent=1 // pred_check_branch
      %151 = sbr.rel (0) target = $region17
    $region16: #{tpu_custom_call.1} parent=1 // pred_region
      %152 = dma.done [#allocation3], 256
    $region17: #{tpu_custom_call.1} parent=1 // pred_fallthru
      _
    %153 = vsyncpa [#allocation3], 1

</llo_original>
